<compile_context>
chip_gen: v7x
topology: tpu7x:2x2x1
jax: 0.10.0
libtpu: 0.0.40
codegen_flags: <defaults>
</compile_context>

<pallas_src>
import functools

import jax
import jax.numpy as jnp
from jax import lax
from jax.experimental import pallas as pl
from jax.experimental.pallas import tpu as pltpu


# --------------------------------------------------------------------------- #
# Kernels
# --------------------------------------------------------------------------- #
def _vgcn_kernel_resident(at_ref, xt_ref, wt_ref, bt_ref, o_ref,
                          *, k, alpha, lambd, c):
    """Gridless fused forward with A^T resident in VMEM (lane-dense [C, N] layout)."""
    c_prop = alpha * lambd / (1.0 + lambd)
    c_anchor = alpha / (1.0 + lambd)
    c_keep = 1.0 - alpha

    at = at_ref[...]                                          # [N, N]  A^T (f32 or bf16)

    # Fused MLP1|MLP2 in one MXU call:  [2C, F] @ [F, N] -> [2C, N]
    init = (jnp.dot(wt_ref[...], xt_ref[...],
                    preferred_element_type=jnp.float32) + bt_ref[...])
    init1 = init[:c, :]
    init2 = init[c:, :]
    # Hoist loop-invariant anchor terms (one VPU mul per element per step saved).
    anchor1 = c_anchor * init1
    anchor2 = c_anchor * init2

    def prop(h, anchor):
        # H_new^T = (1-a) H^T + a*l/(1+l) * (H^T @ A^T) + a/(1+l) * H0^T
        ah = jnp.dot(h.astype(at.dtype), at, preferred_element_type=jnp.float32)
        return c_keep * h + c_prop * ah + anchor

    # H ([C, N] f32) lives in VMEM, not vregs, for realistic N.  Unrolling buys scheduler
    # visibility / removes loop overhead; the cap only bounds code size & compile time for
    # very deep propagation, not vreg pressure.
    unroll = bool(k <= 32)
    h = lax.fori_loop(0, k, lambda _, hh: prop(hh, anchor1), init1, unroll=unroll)
    h = lax.fori_loop(0, k, lambda _, hh: prop(hh, anchor2), h, unroll=unroll)

    o_ref[...] = h.astype(o_ref.dtype)


def _vgcn_kernel_tiled(at_ref, h0_ref, anch_ref, o_ref, h_ref,
                       *, k, alpha, lambd, tn, tk):
    """Tiled/streamed forward for A too large for VMEM residency.

    grid = (2k propagation steps, N//tn output-column tiles, N//tk reduction tiles).
    A^T tiles are streamed (multi-buffered by the Pallas pipeline); the small H state
    ([2, C, N] double buffer over steps) lives in VMEM scratch; H0 and the anchors are
    computed wrapper-side and sit resident as constant-index inputs.
    """
    s = pl.program_id(0)      # propagation step (0..2k-1: block1 then block2)
    j = pl.program_id(1)      # output column tile
    r = pl.program_id(2)      # reduction tile
    nr = pl.num_programs(2)

    c_prop = alpha * lambd / (1.0 + lambd)
    c_keep = 1.0 - alpha

    old = s % 2               # slot holding H^t
    new = 1 - old             # slot receiving H^{t+1}

    # One-time prologue: seed the resident H state with H0 (= init1).  The heavy MLP
    # matmul has been moved to the wrapper; this is just a VMEM copy.
    @pl.when((s == 0) & (j == 0) & (r == 0))
    def _():
        h_ref[0] = h0_ref[...]

    col0 = pl.multiple_of(j * tn, 128)
    row0 = pl.multiple_of(r * tk, 128)

    # Partial product for this (j, r) tile:  H^T[:, r-tile] @ A^T[r-tile, j-tile]
    h_old_r = h_ref[old, :, pl.ds(row0, tk)]                              # [C, tk]
    part = jnp.dot(h_old_r.astype(at_ref.dtype), at_ref[...],
                   preferred_element_type=jnp.float32)                    # [C, tn]

    @pl.when(r == 0)
    def _():
        h_ref[new, :, pl.ds(col0, tn)] = part

    @pl.when(r > 0)
    def _():
        h_ref[new, :, pl.ds(col0, tn)] += part

    # Finalize this output tile once the reduction over r is complete.
    @pl.when(r == nr - 1)
    def _():
        sel = s // k          # 0 -> block1 anchor (init1), 1 -> block2 anchor (init2)
        h_new = (c_keep * h_ref[old, :, pl.ds(col0, tn)]
                 + c_prop * h_ref[new, :, pl.ds(col0, tn)]
                 + anch_ref[sel, :, pl.ds(col0, tn)])
        h_ref[new, :, pl.ds(col0, tn)] = h_new
        o_ref[...] = h_new.astype(o_ref.dtype)


# --------------------------------------------------------------------------- #
# Wrapper
# --------------------------------------------------------------------------- #
def _full_spec(shape):
    return pl.BlockSpec(shape, lambda: (0,) * len(shape))


def _vmem_budget():
    """Returns (capacity, vmem_limit_ceiling, default_resident_budget) in bytes."""
    cap = None
    try:
        info = pltpu.get_tpu_info()
        for attr in ("vmem_capacity_bytes", "vmem_bytes", "vmem_size_bytes"):
            v = getattr(info, attr, None)
            if v:
                cap = int(v)
                break
    except Exception:
        cap = None
    if cap is None:
        cap = 64 << 20   # conservative fallback (v7x per-TC capacity)
    if cap >= (96 << 20):
        # v5e / v6e: 128 MiB physical VMEM; leave ~16 MiB headroom for Mosaic scratch.
        return cap, cap - (16 << 20), 100 << 20
    # v7x: 64 MiB per TensorCore; cap the request at ~56 MiB, resident budget ~46 MiB.
    return cap, min(cap - (8 << 20), 56 << 20), 46 << 20


def vgcn_block_net(a_hat, x, w1, b1, w2, b2, *, k, alpha, lambd,
                   a_dtype=jnp.float32, symmetric=True,
                   tile_n=1024, tile_k=512,
                   force_tiled=False, resident_budget_bytes=None):
    """VGCNBlockNet forward (mlp1 -> block1 -> mlp2 -> block2) on TPU.

    a_dtype: dtype of the adjacency operand for the propagation matmuls.  float32 (default)
             matches the PyTorch reference; jnp.bfloat16 halves A's VMEM/HBM bytes and
             doubles MXU rate (f32 accumulation) at the cost of error that compounds over
             the 2k propagation steps.
    symmetric: if True (GCN-normalized adjacency is symmetric), skip the wrapper-side
             transpose of A — saves a full N^2 HBM read+write pre-pass.  Set False for a
             non-symmetric propagation matrix.
    Picks the gridless VMEM-resident kernel when A fits a generation-aware budget
    (queried via pltpu.get_tpu_info: ~100 MiB on v5e/v6e, ~46 MiB on v7x); otherwise
    the tiled kernel that streams A and keeps only the tiny H state resident.
    """
    n, f = x.shape
    c = w1.shape[1]
    k = int(k)
    a_itemsize = jnp.dtype(a_dtype).itemsize

    cap, vmem_ceiling, default_budget = _vmem_budget()
    if resident_budget_bytes is None:
        resident_budget_bytes = default_budget
    resident_budget_bytes = min(int(resident_budget_bytes), vmem_ceiling)

    # Transposed, lane-dense operands: node axis N on the 128-lane axis.  For symmetric
    # A_hat, A^T == A, so no transpose pre-pass is needed.
    a = jnp.asarray(a_hat)
    at = a.astype(a_dtype) if symmetric else a.T.astype(a_dtype)          # A^T  [N, N]
    xt = jnp.asarray(x, jnp.float32).T                                    # X^T  [F, N]
    wt = jnp.concatenate([w1, w2], axis=1).T.astype(jnp.float32)          # [2C, F]
    bt = jnp.concatenate([jnp.reshape(b1, (1, c)),
                          jnp.reshape(b2, (1, c))], axis=1).T.astype(jnp.float32)  # [2C, 1]

    # VMEM accounting for the resident path: A^T + (xt, wt, bt) + H state, AH temporaries,
    # anchors and the output slab (all VMEM-resident; ~8*C*N f32 covers them with slack).
    small_bytes = (f * n + 2 * c * f + 2 * c + 8 * c * n) * 4
    resident_bytes = n * n * a_itemsize + small_bytes
    use_resident = (k == 0) or (not force_tiled and resident_bytes <= resident_budget_bytes)

    if use_resident:
        vmem_limit = int(min(max(resident_bytes + (4 << 20), 32 << 20), vmem_ceiling))
        kernel = functools.partial(_vgcn_kernel_resident, k=k,
                                   alpha=float(alpha), lambd=float(lambd), c=c)
        # TODO(synk): v7x dual-TC (megacore) split of the resident propagation — shard A^T
        # columns across the two TensorCores and exchange the small [C,N] H state per step
        # via VMEM_SHARED/CMEM + core_barrier — not implemented.
        out_t = pl.pallas_call(
            kernel,
            out_shape=jax.ShapeDtypeStruct((c, n), jnp.float32),
            in_specs=[_full_spec((n, n)), _full_spec((f, n)),
                      _full_spec((2 * c, f)), _full_spec((2 * c, 1))],
            out_specs=_full_spec((c, n)),
            compiler_params=pltpu.CompilerParams(vmem_limit_bytes=vmem_limit),
        )(at, xt, wt, bt)
    else:
        tn = min(int(tile_n), n)
        tk = min(int(tile_k), n)
        if (n % tn) or (n % tk) or (tn % 128) or (tk % 128):
            raise ValueError(f"tiled path needs tiles that are multiples of 128 and divide N={n}")

        # Fused MLPs and anchors computed wrapper-side (tiny [2C,F]@[F,N] matmul); keeps
        # xt/wt/bt out of the streaming kernel's VMEM and removes the cold matmul prologue
        # from the hot loop.
        c_anchor = float(alpha) / (1.0 + float(lambd))
        init_t = (wt @ xt) + bt                                            # [2C, N] f32
        init1_t = init_t[:c]
        anchors = jnp.stack([c_anchor * init1_t, c_anchor * init_t[c:]])   # [2, C, N]

        tiled_bytes = (4 * tk * tn * a_itemsize       # streamed A^T tiles (Buffered(3)+slack)
                       + 2 * 3 * c * n * 4            # H0 + anchors inputs (worst-case 2 bufs)
                       + 2 * c * n * 4                # H state scratch (2 slots)
                       + 2 * c * tn * 4)              # output tile buffers
        vmem_limit = int(min(max(tiled_bytes + (8 << 20), 32 << 20), vmem_ceiling))

        a_index = lambda s, j, r: (r, j)
        try:
            # Deeper pipelining on the streamed A^T tiles (the only big HBM stream here).
            a_spec = pl.BlockSpec((tk, tn), a_index, pipeline_mode=pl.Buffered(3))
        except TypeError:
            a_spec = pl.BlockSpec((tk, tn), a_index)

        kernel = functools.partial(_vgcn_kernel_tiled, k=k, alpha=float(alpha),
                                   lambd=float(lambd), tn=tn, tk=tk)
        # TODO(synk): pin a resident slab of A^T (v5e/v6e have >100 MiB of idle VMEM on this
        # path) and stream only the remainder; int8/fp8 adjacency quantization likewise.
        out_t = pl.pallas_call(
            kernel,
            out_shape=jax.ShapeDtypeStruct((c, n), jnp.float32),
            grid=(2 * k, n // tn, n // tk),
            in_specs=[
                a_spec,                                               # A^T tiles, streamed
                pl.BlockSpec((c, n), lambda s, j, r: (0, 0)),         # H0 (init1), resident
                pl.BlockSpec((2, c, n), lambda s, j, r: (0, 0, 0)),   # anchors, resident
            ],
            out_specs=pl.BlockSpec((c, tn), lambda s, j, r: (0, j)),
            scratch_shapes=[pltpu.VMEM((2, c, n), jnp.float32)],      # H^t / H^{t+1} buffers
            compiler_params=pltpu.CompilerParams(
                # Step axis is a recurrence, reduction axis accumulates: all "arbitrary".
                dimension_semantics=("arbitrary", "arbitrary", "arbitrary"),
                vmem_limit_bytes=vmem_limit),
        )(at, init1_t, anchors)

    return out_t.T  # back to [N, C]


# --------------------------------------------------------------------------- #
# Pure-JAX reference and test harness
# --------------------------------------------------------------------------- #
def _reference(a_hat, x, w1, b1, w2, b2, *, k, alpha, lambd):
    c_prop = alpha * lambd / (1.0 + lambd)
    c_anchor = alpha / (1.0 + lambd)
    c_keep = 1.0 - alpha

    def block(h, h0):
        for _ in range(k):
            h = c_keep * h + c_prop * (a_hat @ h) + c_anchor * h0
        return h

    init1 = x @ w1 + b1
    h = block(init1, init1)
    init2 = x @ w2 + b2
    return block(h, init2)


def _normalized_adjacency(key, n):
    """Random symmetric adjacency + self loops, D^-1/2 (A+I) D^-1/2."""
    logits = jax.random.uniform(key, (n, n))
    adj = (logits + logits.T > 1.4).astype(jnp.float32)
    adj = adj + jnp.eye(n, dtype=jnp.float32)
    deg = adj.sum(axis=1)
    d_inv_sqrt = 1.0 / jnp.sqrt(deg)
    return adj * d_inv_sqrt[:, None] * d_inv_sqrt[None, :]


if __name__ == "__main__":
    N, F, C = 256, 32, 16          # nodes, num_feats, num_classes
    K, ALPHA, LAMBD = 4, 1.0, 1.0  # VGCNBlock hyper-params (module defaults)

    key = jax.random.PRNGKey(0)
    k_a, k_x, k_w1, k_b1, k_w2, k_b2 = jax.random.split(key, 6)

    a_hat = _normalized_adjacency(k_a, N)
    x = jax.random.normal(k_x, (N, F), dtype=jnp.float32)
    scale = 1.0 / jnp.sqrt(jnp.float32(F))
    w1 = jax.random.normal(k_w1, (F, C), dtype=jnp.float32) * scale
    b1 = jax.random.normal(k_b1, (1, C), dtype=jnp.float32) * 0.1
    w2 = jax.random.normal(k_w2, (F, C), dtype=jnp.float32) * scale
    b2 = jax.random.normal(k_b2, (1, C), dtype=jnp.float32) * 0.1

    ref = _reference(a_hat, x, w1, b1, w2, b2, k=K, alpha=ALPHA, lambd=LAMBD)

    # 1) Resident path, exact f32 adjacency (default), symmetric fast path (no transpose).
    out_f32 = vgcn_block_net(a_hat, x, w1, b1, w2, b2, k=K, alpha=ALPHA, lambd=LAMBD)
    out_f32 = jax.block_until_ready(out_f32)
    assert out_f32.shape == (N, C)
    assert jnp.allclose(out_f32, ref, atol=1e-3, rtol=1e-3), "resident f32 kernel mismatch"

    # 2) Resident path with the explicit-transpose branch (symmetric=False) — must agree.
    out_tr = vgcn_block_net(a_hat, x, w1, b1, w2, b2, k=K, alpha=ALPHA, lambd=LAMBD,
                            symmetric=False)
    out_tr = jax.block_until_ready(out_tr)
    assert jnp.allclose(out_tr, ref, atol=1e-3, rtol=1e-3), "resident f32 (transposed) mismatch"

    # 3) Resident path, bf16 adjacency opt-in (fast MXU path) -- looser tolerance.
    out_bf16 = vgcn_block_net(a_hat, x, w1, b1, w2, b2, k=K, alpha=ALPHA, lambd=LAMBD,
                              a_dtype=jnp.bfloat16)
    out_bf16 = jax.block_until_ready(out_bf16)
    assert jnp.allclose(out_bf16, ref, atol=5e-2, rtol=5e-2), "resident bf16 kernel mismatch"

    # 4) Tiled/streamed path (forced at small N with 128x128 A tiles), exact f32 adjacency.
    out_tiled = vgcn_block_net(a_hat, x, w1, b1, w2, b2, k=K, alpha=ALPHA, lambd=LAMBD,
                               force_tiled=True, tile_n=128, tile_k=128)
    out_tiled = jax.block_until_ready(out_tiled)
    assert jnp.allclose(out_tiled, ref, atol=1e-3, rtol=1e-3), "tiled kernel mismatch"

    print("KERNEL_OK")
</pallas_src>

<mosaic_0001>
module attributes {stable_mosaic.version = 11 : i64} {
  func.func @_vgcn_kernel_resident(%arg0: memref<256x256xf32, #tpu.memory_space<vmem>>, %arg1: memref<32x256xf32, #tpu.memory_space<vmem>>, %arg2: memref<32x32xf32, #tpu.memory_space<vmem>>, %arg3: memref<32x1xf32, #tpu.memory_space<vmem>>, %arg4: memref<16x256xf32, #tpu.memory_space<vmem>>) attributes {dimension_semantics = [], scalar_prefetch = 0 : i64, scratch_operands = 0 : i64, tpu.core_type = #tpu.core_type<tc>} {
    %c0 = arith.constant 0 : index
    %c0_0 = arith.constant 0 : index
    %0 = vector.load %arg0[%c0, %c0_0] : memref<256x256xf32, #tpu.memory_space<vmem>>, vector<256x256xf32>
    %c0_1 = arith.constant 0 : index
    %c0_2 = arith.constant 0 : index
    %1 = vector.load %arg2[%c0_1, %c0_2] : memref<32x32xf32, #tpu.memory_space<vmem>>, vector<32x32xf32>
    %c0_3 = arith.constant 0 : index
    %c0_4 = arith.constant 0 : index
    %2 = vector.load %arg1[%c0_3, %c0_4] : memref<32x256xf32, #tpu.memory_space<vmem>>, vector<32x256xf32>
    %cst = arith.constant dense<0.000000e+00> : vector<32x256xf32>
    %3 = tpu.matmul %1, %2, %cst {dimension_numbers = #tpu.dot_dimension_numbers<[1], [0], [0], [1], [0, 0, 1, 1], [], []>} : vector<32x32xf32>, vector<32x256xf32>, vector<32x256xf32> -> vector<32x256xf32>
    %c0_5 = arith.constant 0 : index
    %c0_6 = arith.constant 0 : index
    %4 = vector.load %arg3[%c0_5, %c0_6] : memref<32x1xf32, #tpu.memory_space<vmem>>, vector<32x1xf32>
    %5 = vector.broadcast %4 : vector<32x1xf32> to vector<32x256xf32>
    %6 = arith.addf %3, %5 : vector<32x256xf32>
    %7 = vector.extract_strided_slice %6 {offsets = [0, 0], sizes = [16, 256], strides = [1, 1]} : vector<32x256xf32> to vector<16x256xf32>
    %8 = vector.extract_strided_slice %6 {offsets = [16, 0], sizes = [16, 256], strides = [1, 1]} : vector<32x256xf32> to vector<16x256xf32>
    %cst_7 = arith.constant 5.000000e-01 : f32
    %9 = vector.broadcast %cst_7 : f32 to vector<16x256xf32>
    %10 = arith.mulf %9, %7 : vector<16x256xf32>
    %cst_8 = arith.constant 5.000000e-01 : f32
    %11 = vector.broadcast %cst_8 : f32 to vector<16x256xf32>
    %12 = arith.mulf %11, %8 : vector<16x256xf32>
    %c0_i32 = arith.constant 0 : i32
    %cst_9 = arith.constant dense<0.000000e+00> : vector<16x256xf32>
    %13 = tpu.matmul %7, %0, %cst_9 {dimension_numbers = #tpu.dot_dimension_numbers<[1], [0], [0], [1], [0, 0, 1, 1], [], []>} : vector<16x256xf32>, vector<256x256xf32>, vector<16x256xf32> -> vector<16x256xf32>
    %cst_10 = arith.constant 0.000000e+00 : f32
    %14 = vector.broadcast %cst_10 : f32 to vector<16x256xf32>
    %15 = arith.mulf %14, %7 : vector<16x256xf32>
    %cst_11 = arith.constant 5.000000e-01 : f32
    %16 = vector.broadcast %cst_11 : f32 to vector<16x256xf32>
    %17 = arith.mulf %16, %13 : vector<16x256xf32>
    %18 = arith.addf %15, %17 : vector<16x256xf32>
    %19 = arith.addf %18, %10 : vector<16x256xf32>
    %c1_i32 = arith.constant 1 : i32
    %cst_12 = arith.constant dense<0.000000e+00> : vector<16x256xf32>
    %20 = tpu.matmul %19, %0, %cst_12 {dimension_numbers = #tpu.dot_dimension_numbers<[1], [0], [0], [1], [0, 0, 1, 1], [], []>} : vector<16x256xf32>, vector<256x256xf32>, vector<16x256xf32> -> vector<16x256xf32>
    %cst_13 = arith.constant 0.000000e+00 : f32
    %21 = vector.broadcast %cst_13 : f32 to vector<16x256xf32>
    %22 = arith.mulf %21, %19 : vector<16x256xf32>
    %cst_14 = arith.constant 5.000000e-01 : f32
    %23 = vector.broadcast %cst_14 : f32 to vector<16x256xf32>
    %24 = arith.mulf %23, %20 : vector<16x256xf32>
    %25 = arith.addf %22, %24 : vector<16x256xf32>
    %26 = arith.addf %25, %10 : vector<16x256xf32>
    %c2_i32 = arith.constant 2 : i32
    %cst_15 = arith.constant dense<0.000000e+00> : vector<16x256xf32>
    %27 = tpu.matmul %26, %0, %cst_15 {dimension_numbers = #tpu.dot_dimension_numbers<[1], [0], [0], [1], [0, 0, 1, 1], [], []>} : vector<16x256xf32>, vector<256x256xf32>, vector<16x256xf32> -> vector<16x256xf32>
    %cst_16 = arith.constant 0.000000e+00 : f32
    %28 = vector.broadcast %cst_16 : f32 to vector<16x256xf32>
    %29 = arith.mulf %28, %26 : vector<16x256xf32>
    %cst_17 = arith.constant 5.000000e-01 : f32
    %30 = vector.broadcast %cst_17 : f32 to vector<16x256xf32>
    %31 = arith.mulf %30, %27 : vector<16x256xf32>
    %32 = arith.addf %29, %31 : vector<16x256xf32>
    %33 = arith.addf %32, %10 : vector<16x256xf32>
    %c3_i32 = arith.constant 3 : i32
    %cst_18 = arith.constant dense<0.000000e+00> : vector<16x256xf32>
    %34 = tpu.matmul %33, %0, %cst_18 {dimension_numbers = #tpu.dot_dimension_numbers<[1], [0], [0], [1], [0, 0, 1, 1], [], []>} : vector<16x256xf32>, vector<256x256xf32>, vector<16x256xf32> -> vector<16x256xf32>
    %cst_19 = arith.constant 0.000000e+00 : f32
    %35 = vector.broadcast %cst_19 : f32 to vector<16x256xf32>
    %36 = arith.mulf %35, %33 : vector<16x256xf32>
    %cst_20 = arith.constant 5.000000e-01 : f32
    %37 = vector.broadcast %cst_20 : f32 to vector<16x256xf32>
    %38 = arith.mulf %37, %34 : vector<16x256xf32>
    %39 = arith.addf %36, %38 : vector<16x256xf32>
    %40 = arith.addf %39, %10 : vector<16x256xf32>
    %c0_i32_21 = arith.constant 0 : i32
    %cst_22 = arith.constant dense<0.000000e+00> : vector<16x256xf32>
    %41 = tpu.matmul %40, %0, %cst_22 {dimension_numbers = #tpu.dot_dimension_numbers<[1], [0], [0], [1], [0, 0, 1, 1], [], []>} : vector<16x256xf32>, vector<256x256xf32>, vector<16x256xf32> -> vector<16x256xf32>
    %cst_23 = arith.constant 0.000000e+00 : f32
    %42 = vector.broadcast %cst_23 : f32 to vector<16x256xf32>
    %43 = arith.mulf %42, %40 : vector<16x256xf32>
    %cst_24 = arith.constant 5.000000e-01 : f32
    %44 = vector.broadcast %cst_24 : f32 to vector<16x256xf32>
    %45 = arith.mulf %44, %41 : vector<16x256xf32>
    %46 = arith.addf %43, %45 : vector<16x256xf32>
    %47 = arith.addf %46, %12 : vector<16x256xf32>
    %c1_i32_25 = arith.constant 1 : i32
    %cst_26 = arith.constant dense<0.000000e+00> : vector<16x256xf32>
    %48 = tpu.matmul %47, %0, %cst_26 {dimension_numbers = #tpu.dot_dimension_numbers<[1], [0], [0], [1], [0, 0, 1, 1], [], []>} : vector<16x256xf32>, vector<256x256xf32>, vector<16x256xf32> -> vector<16x256xf32>
    %cst_27 = arith.constant 0.000000e+00 : f32
    %49 = vector.broadcast %cst_27 : f32 to vector<16x256xf32>
    %50 = arith.mulf %49, %47 : vector<16x256xf32>
    %cst_28 = arith.constant 5.000000e-01 : f32
    %51 = vector.broadcast %cst_28 : f32 to vector<16x256xf32>
    %52 = arith.mulf %51, %48 : vector<16x256xf32>
    %53 = arith.addf %50, %52 : vector<16x256xf32>
    %54 = arith.addf %53, %12 : vector<16x256xf32>
    %c2_i32_29 = arith.constant 2 : i32
    %cst_30 = arith.constant dense<0.000000e+00> : vector<16x256xf32>
    %55 = tpu.matmul %54, %0, %cst_30 {dimension_numbers = #tpu.dot_dimension_numbers<[1], [0], [0], [1], [0, 0, 1, 1], [], []>} : vector<16x256xf32>, vector<256x256xf32>, vector<16x256xf32> -> vector<16x256xf32>
    %cst_31 = arith.constant 0.000000e+00 : f32
    %56 = vector.broadcast %cst_31 : f32 to vector<16x256xf32>
    %57 = arith.mulf %56, %54 : vector<16x256xf32>
    %cst_32 = arith.constant 5.000000e-01 : f32
    %58 = vector.broadcast %cst_32 : f32 to vector<16x256xf32>
    %59 = arith.mulf %58, %55 : vector<16x256xf32>
    %60 = arith.addf %57, %59 : vector<16x256xf32>
    %61 = arith.addf %60, %12 : vector<16x256xf32>
    %c3_i32_33 = arith.constant 3 : i32
    %cst_34 = arith.constant dense<0.000000e+00> : vector<16x256xf32>
    %62 = tpu.matmul %61, %0, %cst_34 {dimension_numbers = #tpu.dot_dimension_numbers<[1], [0], [0], [1], [0, 0, 1, 1], [], []>} : vector<16x256xf32>, vector<256x256xf32>, vector<16x256xf32> -> vector<16x256xf32>
    %cst_35 = arith.constant 0.000000e+00 : f32
    %63 = vector.broadcast %cst_35 : f32 to vector<16x256xf32>
    %64 = arith.mulf %63, %61 : vector<16x256xf32>
    %cst_36 = arith.constant 5.000000e-01 : f32
    %65 = vector.broadcast %cst_36 : f32 to vector<16x256xf32>
    %66 = arith.mulf %65, %62 : vector<16x256xf32>
    %67 = arith.addf %64, %66 : vector<16x256xf32>
    %68 = arith.addf %67, %12 : vector<16x256xf32>
    %c0_37 = arith.constant 0 : index
    %c0_38 = arith.constant 0 : index
    %69 = vector.load %arg4[%c0_37, %c0_38] : memref<16x256xf32, #tpu.memory_space<vmem>>, vector<16x256xf32>
    tpu.vector_store %arg4[%c0_37, %c0_38], %68 {strides = array<i32>} : memref<16x256xf32, #tpu.memory_space<vmem>>, vector<16x256xf32>,
    return
  }
}

</mosaic_0001>

<llo_original>
// kernel: tpu_custom_call.1
$region0: #{tpu_custom_call.1}
  #allocation0 [shape = 'u32[]', space=smem, size = 0x4, offset = 0x4, fixed_abs, tag = 'smem constant byte address 0x4 - core index']
  #allocation1 [shape = 'u32[144,128]{1,0:T(1,128)}', space=vmem, size = 0x12000, scoped, tag = 'internal scratch']
  %s0 = inlined_call_operand.hbm [shape: f32[256,256], index: 0, kind: input, shape index: {}]
  %s1 = inlined_call_operand.hbm [shape: f32[32,256], index: 1, kind: input, shape index: {}]
  %s2 = inlined_call_operand.vmem [shape: f32[32,32], index: 2, kind: input, shape index: {}]
  %s3 = inlined_call_operand.vmem [shape: f32[32,1], index: 3, kind: input, shape index: {}]
  %s4 = inlined_call_operand.hbm [shape: f32[16,256], index: 4, kind: output, shape index: {}]
  %s5 = sld [smem:[#allocation0]]
  $region34: #{tpu_custom_call.1} parent=0
    _
  %s7 = ssub.s32 1, %s5
  %s8 = scalar_select 0, %s7, %s5
  $region1: #{tpu_custom_call.1} parent=0
    #allocation2 [shape = 'u8[262144]{0}', space=vmem, size = 0x40000, scoped, tag = 'input window, operand 0, single buffered']
    #allocation3 [shape = 's32[1]{0}', space=sflag, size = 0x4, scoped, tag = 'scoped memory for tpu_custom_call.1']
    #allocation4 [shape = 's32[1]{0}', space=sflag, size = 0x4, scoped, tag = 'scoped memory for tpu_custom_call.1']
    #allocation5 [shape = 'u8[32768]{0}', space=vmem, size = 0x8000, scoped, tag = 'input window, operand 1, single buffered']
    #allocation6 [shape = 's32[1]{0}', space=sflag, size = 0x4, scoped, tag = 'scoped memory for tpu_custom_call.1']
    #allocation7 [shape = 'u8[16384]{0}', space=vmem, size = 0x4000, scoped, tag = 'output window, operand 0, single buffered']
    %9 = vsyncpa [#allocation3], 0
    %10 = vsyncpa [#allocation6], 0
    %11 = vsyncpa [#allocation4], 0
    // Predicated region
    $region2: #{tpu_custom_call.1} parent=1 // pred_check
      _
    $region3: #{tpu_custom_call.1} parent=1 // pred_check_branch
      %13 = sbr.rel (0) target = $region5
    $region4: #{tpu_custom_call.1} parent=1 // pred_region
      %s15 = ssub.s32 8192, 8192
      %16 = vsyncadd [#allocation3], %s15
      %s17 = sshll.u32 [#allocation2], 4
      %s18 = int_to_ptr.vmem [resolvable:$true] %s17
      %23 = dma.hbm_to_vmem [thread:$0]  %s0, 8192, %s18, [#allocation3], 256, 256, 16
    $region5: #{tpu_custom_call.1} parent=1 // pred_fallthru
      _
    // Predicated region
    $region6: #{tpu_custom_call.1} parent=1 // pred_check
      _
    $region7: #{tpu_custom_call.1} parent=1 // pred_check_branch
      %25 = sbr.rel (0) target = $region9
    $region8: #{tpu_custom_call.1} parent=1 // pred_region
      %s27 = ssub.s32 1024, 1024
      %28 = vsyncadd [#allocation6], %s27
      %s29 = sshll.u32 [#allocation5], 4
      %s30 = int_to_ptr.vmem [resolvable:$true] %s29
      %35 = dma.hbm_to_vmem [thread:$0]  %s1, 1024, %s30, [#allocation6], 256, 256, 16
    $region9: #{tpu_custom_call.1} parent=1 // pred_fallthru
      _
    // Predicated region
    $region10: #{tpu_custom_call.1} parent=1 // pred_check
      _
    $region11: #{tpu_custom_call.1} parent=1 // pred_check_branch
      %37 = sbr.rel (0) target = $region13
    $region12: #{tpu_custom_call.1} parent=1 // pred_region
      _
    $region13: #{tpu_custom_call.1} parent=1 // pred_fallthru
      _
    // Predicated region
    $region14: #{tpu_custom_call.1} parent=1 // pred_check
      _
    $region15: #{tpu_custom_call.1} parent=1 // pred_check_branch
      %39 = sbr.rel (0) target = $region17
    $region16: #{tpu_custom_call.1} parent=1 // pred_region
      _
    $region17: #{tpu_custom_call.1} parent=1 // pred_fallthru
      _
    // Predicated region
    $region18: #{tpu_custom_call.1} parent=1 // pred_check
      _
    $region19: #{tpu_custom_call.1} parent=1 // pred_check_branch
      %41 = sbr.rel (0) target = $region21
    $region20: #{tpu_custom_call.1} parent=1 // pred_region
      %42 = dma.done [#allocation3], 8192
    $region21: #{tpu_custom_call.1} parent=1 // pred_fallthru
      _
    // Predicated region
    $region22: #{tpu_custom_call.1} parent=1 // pred_check
      _
    $region23: #{tpu_custom_call.1} parent=1 // pred_check_branch
      %44 = sbr.rel (0) target = $region25
    $region24: #{tpu_custom_call.1} parent=1 // pred_region
      %45 = dma.done [#allocation6], 1024
    $region25: #{tpu_custom_call.1} parent=1 // pred_fallthru
      _
    %v46 = vld [vmem:[#allocation2] sm:$0xff]
    %v47 = vld [vmem:[#allocation2 + $0x8] sm:$0xff]
    %v48 = vld [vmem:[#allocation2 + $0x10] sm:$0xff]
    %v49 = vld [vmem:[#allocation2 + $0x18] sm:$0xff]
    %v50 = vld [vmem:[#allocation2 + $0x20] sm:$0xff]
    %v51 = vld [vmem:[#allocation2 + $0x28] sm:$0xff]
    %v52 = vld [vmem:[#allocation2 + $0x30] sm:$0xff]
    %v53 = vld [vmem:[#allocation2 + $0x38] sm:$0xff]
    %v54 = vld [vmem:[#allocation2 + $0x40] sm:$0xff]
    %v55 = vld [vmem:[#allocation2 + $0x48] sm:$0xff]
    %v56 = vld [vmem:[#allocation2 + $0x50] sm:$0xff]
    %v57 = vld [vmem:[#allocation2 + $0x58] sm:$0xff]
    %v58 = vld [vmem:[#allocation2 + $0x60] sm:$0xff]
    %v59 = vld [vmem:[#allocation2 + $0x68] sm:$0xff]
    %v60 = vld [vmem:[#allocation2 + $0x70] sm:$0xff]
    %v61 = vld [vmem:[#allocation2 + $0x78] sm:$0xff]
    %v62 = vld [vmem:[#allocation2 + $0x80] sm:$0xff]
    %v63 = vld [vmem:[#allocation2 + $0x88] sm:$0xff]
    %v64 = vld [vmem:[#allocation2 + $0x90] sm:$0xff]
    %v65 = vld [vmem:[#allocation2 + $0x98] sm:$0xff]
    %v66 = vld [vmem:[#allocation2 + $0xa0] sm:$0xff]
    %v67 = vld [vmem:[#allocation2 + $0xa8] sm:$0xff]
    %v68 = vld [vmem:[#allocation2 + $0xb0] sm:$0xff]
    %v69 = vld [vmem:[#allocation2 + $0xb8] sm:$0xff]
    %v70 = vld [vmem:[#allocation2 + $0xc0] sm:$0xff]
    %v71 = vld [vmem:[#allocation2 + $0xc8] sm:$0xff]
    %v72 = vld [vmem:[#allocation2 + $0xd0] sm:$0xff]
    %v73 = vld [vmem:[#allocation2 + $0xd8] sm:$0xff]
    %v74 = vld [vmem:[#allocation2 + $0xe0] sm:$0xff]
    %v75 = vld [vmem:[#allocation2 + $0xe8] sm:$0xff]
    %v76 = vld [vmem:[#allocation2 + $0xf0] sm:$0xff]
    %v77 = vld [vmem:[#allocation2 + $0xf8] sm:$0xff]
    %v78 = vld [vmem:[#allocation2 + $0x100] sm:$0xff]
    %v79 = vld [vmem:[#allocation2 + $0x108] sm:$0xff]
    %v80 = vld [vmem:[#allocation2 + $0x110] sm:$0xff]
    %v81 = vld [vmem:[#allocation2 + $0x118] sm:$0xff]
    %v82 = vld [vmem:[#allocation2 + $0x120] sm:$0xff]
    %v83 = vld [vmem:[#allocation2 + $0x128] sm:$0xff]
    %v84 = vld [vmem:[#allocation2 + $0x130] sm:$0xff]
    %v85 = vld [vmem:[#allocation2 + $0x138] sm:$0xff]
    %v86 = vld [vmem:[#allocation2 + $0x140] sm:$0xff]
    %v87 = vld [vmem:[#allocation2 + $0x148] sm:$0xff]
    %v88 = vld [vmem:[#allocation2 + $0x150] sm:$0xff]
    %v89 = vld [vmem:[#allocation2 + $0x158] sm:$0xff]
    %v90 = vld [vmem:[#allocation2 + $0x160] sm:$0xff]
    %v91 = vld [vmem:[#allocation2 + $0x168] sm:$0xff]
    %v92 = vld [vmem:[#allocation2 + $0x170] sm:$0xff]
    %v93 = vld [vmem:[#allocation2 + $0x178] sm:$0xff]
    %v94 = vld [vmem:[#allocation2 + $0x180] sm:$0xff]
    %v95 = vld [vmem:[#allocation2 + $0x188] sm:$0xff]
    %v96 = vld [vmem:[#allocation2 + $0x190] sm:$0xff]
    %v97 = vld [vmem:[#allocation2 + $0x198] sm:$0xff]
    %v98 = vld [vmem:[#allocation2 + $0x1a0] sm:$0xff]
    %v99 = vld [vmem:[#allocation2 + $0x1a8] sm:$0xff]
    %v100 = vld [vmem:[#allocation2 + $0x1b0] sm:$0xff]
    %v101 = vld [vmem:[#allocation2 + $0x1b8] sm:$0xff]
    %v102 = vld [vmem:[#allocation2 + $0x1c0] sm:$0xff]
    %v103 = vld [vmem:[#allocation2 + $0x1c8] sm:$0xff]
    %v104 = vld [vmem:[#allocation2 + $0x1d0] sm:$0xff]
    %v105 = vld [vmem:[#allocation2 + $0x1d8] sm:$0xff]
    %v106 = vld [vmem:[#allocation2 + $0x1e0] sm:$0xff]
    %v107 = vld [vmem:[#allocation2 + $0x1e8] sm:$0xff]
    %v108 = vld [vmem:[#allocation2 + $0x1f0] sm:$0xff]
    %v109 = vld [vmem:[#allocation2 + $0x1f8] sm:$0xff]
    %v110 = vld [vmem:[%s2] sm:$0xff]
    %v111 = vld [vmem:[%s2 + $0x8] sm:$0xff]
    %v112 = vld [vmem:[%s2 + $0x10] sm:$0xff]
    %v113 = vld [vmem:[%s2 + $0x18] sm:$0xff]
    %v114 = vld [vmem:[#allocation5] sm:$0xff]
    %v115 = vld [vmem:[#allocation5 + $0x8] sm:$0xff]
    %v116 = vld [vmem:[#allocation5 + $0x10] sm:$0xff]
    %v117 = vld [vmem:[#allocation5 + $0x18] sm:$0xff]
    %v118 = vld [vmem:[#allocation5 + $0x20] sm:$0xff]
    %v119 = vld [vmem:[#allocation5 + $0x28] sm:$0xff]
    %v120 = vld [vmem:[#allocation5 + $0x30] sm:$0xff]
    %v121 = vld [vmem:[#allocation5 + $0x38] sm:$0xff]
    %v122 = vld [vmem:[%s3] sm:$0xff]
    %v123 = vld [vmem:[%s3 + $0x8] sm:$0xff]
    %v124 = vld [vmem:[%s3 + $0x10] sm:$0xff]
    %v125 = vld [vmem:[%s3 + $0x18] sm:$0xff]
    %127 = vset.pattern.permute.xlu0 0
    %128 = vperm.xlu0 %127, %v122
    %v129 = vpop.permute.xlu0 %128
    %132 = vset.pattern.permute.xlu0 0
    %133 = vperm.xlu0 %132, %v123
    %v134 = vpop.permute.xlu0 %133
    %137 = vset.pattern.permute.xlu0 0
    %138 = vperm.xlu0 %137, %v124
    %v139 = vpop.permute.xlu0 %138
    %142 = vset.pattern.permute.xlu0 0
    %143 = vperm.xlu0 %142, %v125
    %v144 = vpop.permute.xlu0 %143
    %vm146 = vcmask 261120
    %v148 = vsel %vm146, %v110, 0
    %v151 = vsel %vm146, %v111, 0
    %v154 = vsel %vm146, %v112, 0
    %v157 = vsel %vm146, %v113, 0
    %159 = vmatprep.subr.mxu0 %v115
    %160 = vmatpush1.msra.mxu0 %v114
    %161 = vmatprep.subr.mxu0 %v117
    %162 = vmatpush1.msra.mxu0 %v116
    %163 = vmatprep.subr.mxu0 %v119
    %164 = vmatpush1.msra.mxu0 %v118
    %165 = vmatprep.subr.mxu0 %v121
    %166 = vmatpush1.msra.mxu0 %v120
    %167 = vmatprep.subr.mxu0 0.0
    %168 = vmatpush1.msra.mxu0 0.0
    %169 = vmatprep.subr.mxu0 0.0
    %170 = vmatpush1.msra.mxu0 0.0
    %171 = vmatprep.subr.mxu0 0.0
    %172 = vmatpush1.msra.mxu0 0.0
    %173 = vmatprep.subr.mxu0 0.0
    %174 = vmatpush1.msra.mxu0 0.0
    %175 = vmatprep.subr.mxu0 0.0
    %176 = vmatpush1.msra.mxu0 0.0
    %177 = vmatprep.subr.mxu0 0.0
    %178 = vmatpush1.msra.mxu0 0.0
    %179 = vmatprep.subr.mxu0 0.0
    %180 = vmatpush1.msra.mxu0 0.0
    %181 = vmatprep.subr.mxu0 0.0
    %182 = vmatpush1.msra.mxu0 0.0
    %183 = vmatprep.subr.mxu0 0.0
    %184 = vmatpush1.msra.mxu0 0.0
    %185 = vmatprep.subr.mxu0 0.0
    %186 = vmatpush1.msra.mxu0 0.0
    %187 = vmatprep.subr.mxu0 0.0
    %188 = vmatpush1.msra.mxu0 0.0
    %189 = vmatprep.subr.mxu0 0.0
    %190 = vmatpush1.msra.mxu0 0.0
    %191 = vmatprep.subr.mxu0 0.0
    %192 = vmatpush1.msra.mxu0 0.0
    %193 = vmatprep.subr.mxu0 0.0
    %194 = vmatpush1.msra.mxu0 0.0
    %195 = vmatprep.subr.mxu0 0.0
    %196 = vmatpush1.msra.mxu0 0.0
    %197 = vmatprep.subr.mxu0 0.0
    %198 = vmatpush1.msra.mxu0 0.0
    %199 = vmatprep.subr.mxu0 0.0
    %200 = vmatpush1.msra.mxu0 0.0
    %201 = vmatprep.subr.mxu0 0.0
    %202 = vmatpush1.msra.mxu0 0.0
    %203 = vmatprep.subr.mxu0 0.0
    %204 = vmatpush1.msra.mxu0 0.0
    %205 = vmatprep.subr.mxu0 0.0
    %206 = vmatpush1.msra.mxu0 0.0
    %207 = vmatprep.subr.mxu0 0.0
    %208 = vmatpush1.msra.mxu0 0.0
    %209 = vmatprep.subr.mxu0 0.0
    %210 = vmatpush1.msra.mxu0 0.0
    %211 = vmatprep.subr.mxu0 0.0
    %212 = vmatpush1.msra.mxu0 0.0
    %213 = vmatprep.subr.mxu0 0.0
    %214 = vmatpush1.msra.mxu0 0.0
    %215 = vmatprep.subr.mxu0 0.0
    %216 = vmatpush1.msra.mxu0 0.0
    %217 = vmatprep.subr.mxu0 0.0
    %218 = vmatpush1.msra.mxu0 0.0
    %219 = vmatprep.subr.mxu0 0.0
    %220 = vmatpush1.msra.mxu0 0.0
    %221 = vmatprep.subr.mxu0 0.0
    %222 = vmatpush1.msra.mxu0 0.0
    %223 = vmatprep.mubr.f32.mxu0 0.0
    %224 = vmatmul.mubr.f32.gmra.mrb[0].mxu0 %v148
    %v225 = vpop.f32.mrb[0].mxu0
    %v226 = vadd.f32 %v129, %v225
    %v227 = vpop.f32.mrb[0].mxu0
    %v228 = vadd.f32 %v129, %v227
    %229 = vmatprep.mubr.f32.mxu0 0.0
    %230 = vmatmul.mubr.f32.gmra.mrb[0].mxu0 %v151
    %v231 = vpop.f32.mrb[0].mxu0
    %v232 = vadd.f32 %v134, %v231
    %v233 = vpop.f32.mrb[0].mxu0
    %v234 = vadd.f32 %v134, %v233
    %235 = vmatprep.mubr.f32.mxu0 0.0
    %236 = vmatmul.mubr.f32.gmra.mrb[0].mxu0 %v154
    %v237 = vpop.f32.mrb[0].mxu0
    %v238 = vadd.f32 %v139, %v237
    %v239 = vpop.f32.mrb[0].mxu0
    %v240 = vadd.f32 %v139, %v239
    %241 = vmatprep.mubr.f32.mxu0 0.0
    %242 = vmatmul.mubr.f32.gmra.mrb[0].mxu0 %v157
    %v243 = vpop.f32.mrb[0].mxu0
    %v244 = vadd.f32 %v144, %v243
    %v245 = vpop.f32.mrb[0].mxu0
    %v246 = vadd.f32 %v144, %v245
    %247 = vdwg.mxu0
    %v248 = vmul.f32 %v226, 0.5
    %v249 = vmul.f32 %v228, 0.5
    %v250 = vmul.f32 %v232, 0.5
    %v251 = vmul.f32 %v234, 0.5
    %v252 = vmul.f32 %v238, 0.5
    %v253 = vmul.f32 %v240, 0.5
    %v254 = vmul.f32 %v244, 0.5
    %v255 = vmul.f32 %v246, 0.5
    %256 = vmatprep.subr.mxu0 %v47
    %257 = vmatpush1.msra.mxu0 %v46
    %258 = vmatprep.subr.mxu0 %v49
    %259 = vmatpush1.msra.mxu0 %v48
    %260 = vmatprep.subr.mxu0 %v51
    %261 = vmatpush1.msra.mxu0 %v50
    %262 = vmatprep.subr.mxu0 %v53
    %263 = vmatpush1.msra.mxu0 %v52
    %264 = vmatprep.subr.mxu0 %v55
    %265 = vmatpush1.msra.mxu0 %v54
    %266 = vmatprep.subr.mxu0 %v57
    %267 = vmatpush1.msra.mxu0 %v56
    %268 = vmatprep.subr.mxu0 %v59
    %269 = vmatpush1.msra.mxu0 %v58
    %270 = vmatprep.subr.mxu0 %v61
    %271 = vmatpush1.msra.mxu0 %v60
    %272 = vmatprep.subr.mxu0 %v63
    %273 = vmatpush1.msra.mxu0 %v62
    %274 = vmatprep.subr.mxu0 %v65
    %275 = vmatpush1.msra.mxu0 %v64
    %276 = vmatprep.subr.mxu0 %v67
    %277 = vmatpush1.msra.mxu0 %v66
    %278 = vmatprep.subr.mxu0 %v69
    %279 = vmatpush1.msra.mxu0 %v68
    %280 = vmatprep.subr.mxu0 %v71
    %281 = vmatpush1.msra.mxu0 %v70
    %282 = vmatprep.subr.mxu0 %v73
    %283 = vmatpush1.msra.mxu0 %v72
    %284 = vmatprep.subr.mxu0 %v75
    %285 = vmatpush1.msra.mxu0 %v74
    %286 = vmatprep.subr.mxu0 %v77
    %287 = vmatpush1.msra.mxu0 %v76
    %288 = vmatprep.subr.mxu0 %v79
    %289 = vmatpush1.msra.mxu0 %v78
    %290 = vmatprep.subr.mxu0 %v81
    %291 = vmatpush1.msra.mxu0 %v80
    %292 = vmatprep.subr.mxu0 %v83
    %293 = vmatpush1.msra.mxu0 %v82
    %294 = vmatprep.subr.mxu0 %v85
    %295 = vmatpush1.msra.mxu0 %v84
    %296 = vmatprep.subr.mxu0 %v87
    %297 = vmatpush1.msra.mxu0 %v86
    %298 = vmatprep.subr.mxu0 %v89
    %299 = vmatpush1.msra.mxu0 %v88
    %300 = vmatprep.subr.mxu0 %v91
    %301 = vmatpush1.msra.mxu0 %v90
    %302 = vmatprep.subr.mxu0 %v93
    %303 = vmatpush1.msra.mxu0 %v92
    %304 = vmatprep.subr.mxu0 %v95
    %305 = vmatpush1.msra.mxu0 %v94
    %306 = vmatprep.subr.mxu0 %v97
    %307 = vmatpush1.msra.mxu0 %v96
    %308 = vmatprep.subr.mxu0 %v99
    %309 = vmatpush1.msra.mxu0 %v98
    %310 = vmatprep.subr.mxu0 %v101
    %311 = vmatpush1.msra.mxu0 %v100
    %312 = vmatprep.subr.mxu0 %v103
    %313 = vmatpush1.msra.mxu0 %v102
    %314 = vmatprep.subr.mxu0 %v105
    %315 = vmatpush1.msra.mxu0 %v104
    %316 = vmatprep.subr.mxu0 %v107
    %317 = vmatpush1.msra.mxu0 %v106
    %318 = vmatprep.subr.mxu0 %v109
    %319 = vmatpush1.msra.mxu0 %v108
    %320 = vmatprep.mubr.f32.mxu0 %v228
    %321 = vmatmul.mubr.f32.gmra.mrb[0].mxu0 %v226
    %v322 = vpop.f32.mrb[0].mxu0
    %v323 = vadd.f32 0.0, %v322
    %v324 = vpop.f32.mrb[0].mxu0
    %v325 = vadd.f32 0.0, %v324
    %326 = vmatprep.mubr.f32.mxu0 %v234
    %327 = vmatmul.mubr.f32.gmra.mrb[0].mxu0 %v232
    %v328 = vpop.f32.mrb[0].mxu0
    %v329 = vadd.f32 0.0, %v328
    %v330 = vpop.f32.mrb[0].mxu0
    %v331 = vadd.f32 0.0, %v330
    %332 = vdwg.mxu0
    %v333 = vmul.f32 %v226, 0.0
    %v334 = vmul.f32 %v228, 0.0
    %v335 = vmul.f32 %v232, 0.0
    %v336 = vmul.f32 %v234, 0.0
    %v337 = vmul.f32 %v323, 0.5
    %v338 = vmul.f32 %v325, 0.5
    %v339 = vmul.f32 %v329, 0.5
    %v340 = vmul.f32 %v331, 0.5
    %v341 = vadd.f32 %v333, %v337
    %v342 = vadd.f32 %v334, %v338
    %v343 = vadd.f32 %v335, %v339
    %v344 = vadd.f32 %v336, %v340
    %v345 = vadd.f32 %v341, %v248
    %v346 = vadd.f32 %v342, %v249
    %v347 = vadd.f32 %v343, %v250
    %v348 = vadd.f32 %v344, %v251
    %349 = vmatprep.subr.mxu0 %v47
    %350 = vmatpush1.msra.mxu0 %v46
    %351 = vmatprep.subr.mxu0 %v49
    %352 = vmatpush1.msra.mxu0 %v48
    %353 = vmatprep.subr.mxu0 %v51
    %354 = vmatpush1.msra.mxu0 %v50
    %355 = vmatprep.subr.mxu0 %v53
    %356 = vmatpush1.msra.mxu0 %v52
    %357 = vmatprep.subr.mxu0 %v55
    %358 = vmatpush1.msra.mxu0 %v54
    %359 = vmatprep.subr.mxu0 %v57
    %360 = vmatpush1.msra.mxu0 %v56
    %361 = vmatprep.subr.mxu0 %v59
    %362 = vmatpush1.msra.mxu0 %v58
    %363 = vmatprep.subr.mxu0 %v61
    %364 = vmatpush1.msra.mxu0 %v60
    %365 = vmatprep.subr.mxu0 %v63
    %366 = vmatpush1.msra.mxu0 %v62
    %367 = vmatprep.subr.mxu0 %v65
    %368 = vmatpush1.msra.mxu0 %v64
    %369 = vmatprep.subr.mxu0 %v67
    %370 = vmatpush1.msra.mxu0 %v66
    %371 = vmatprep.subr.mxu0 %v69
    %372 = vmatpush1.msra.mxu0 %v68
    %373 = vmatprep.subr.mxu0 %v71
    %374 = vmatpush1.msra.mxu0 %v70
    %375 = vmatprep.subr.mxu0 %v73
    %376 = vmatpush1.msra.mxu0 %v72
    %377 = vmatprep.subr.mxu0 %v75
    %378 = vmatpush1.msra.mxu0 %v74
    %379 = vmatprep.subr.mxu0 %v77
    %380 = vmatpush1.msra.mxu0 %v76
    %381 = vmatprep.subr.mxu0 %v79
    %382 = vmatpush1.msra.mxu0 %v78
    %383 = vmatprep.subr.mxu0 %v81
    %384 = vmatpush1.msra.mxu0 %v80
    %385 = vmatprep.subr.mxu0 %v83
    %386 = vmatpush1.msra.mxu0 %v82
    %387 = vmatprep.subr.mxu0 %v85
    %388 = vmatpush1.msra.mxu0 %v84
    %389 = vmatprep.subr.mxu0 %v87
    %390 = vmatpush1.msra.mxu0 %v86
    %391 = vmatprep.subr.mxu0 %v89
    %392 = vmatpush1.msra.mxu0 %v88
    %393 = vmatprep.subr.mxu0 %v91
    %394 = vmatpush1.msra.mxu0 %v90
    %395 = vmatprep.subr.mxu0 %v93
    %396 = vmatpush1.msra.mxu0 %v92
    %397 = vmatprep.subr.mxu0 %v95
    %398 = vmatpush1.msra.mxu0 %v94
    %399 = vmatprep.subr.mxu0 %v97
    %400 = vmatpush1.msra.mxu0 %v96
    %401 = vmatprep.subr.mxu0 %v99
    %402 = vmatpush1.msra.mxu0 %v98
    %403 = vmatprep.subr.mxu0 %v101
    %404 = vmatpush1.msra.mxu0 %v100
    %405 = vmatprep.subr.mxu0 %v103
    %406 = vmatpush1.msra.mxu0 %v102
    %407 = vmatprep.subr.mxu0 %v105
    %408 = vmatpush1.msra.mxu0 %v104
    %409 = vmatprep.subr.mxu0 %v107
    %410 = vmatpush1.msra.mxu0 %v106
    %411 = vmatprep.subr.mxu0 %v109
    %412 = vmatpush1.msra.mxu0 %v108
    %413 = vmatprep.mubr.f32.mxu0 %v346
    %414 = vmatmul.mubr.f32.gmra.mrb[0].mxu0 %v345
    %v415 = vpop.f32.mrb[0].mxu0
    %v416 = vadd.f32 0.0, %v415
    %v417 = vpop.f32.mrb[0].mxu0
    %v418 = vadd.f32 0.0, %v417
    %419 = vmatprep.mubr.f32.mxu0 %v348
    %420 = vmatmul.mubr.f32.gmra.mrb[0].mxu0 %v347
    %v421 = vpop.f32.mrb[0].mxu0
    %v422 = vadd.f32 0.0, %v421
    %v423 = vpop.f32.mrb[0].mxu0
    %v424 = vadd.f32 0.0, %v423
    %425 = vdwg.mxu0
    %v426 = vmul.f32 %v345, 0.0
    %v427 = vmul.f32 %v346, 0.0
    %v428 = vmul.f32 %v347, 0.0
    %v429 = vmul.f32 %v348, 0.0
    %v430 = vmul.f32 %v416, 0.5
    %v431 = vmul.f32 %v418, 0.5
    %v432 = vmul.f32 %v422, 0.5
    %v433 = vmul.f32 %v424, 0.5
    %v434 = vadd.f32 %v426, %v430
    %v435 = vadd.f32 %v427, %v431
    %v436 = vadd.f32 %v428, %v432
    %v437 = vadd.f32 %v429, %v433
    %v438 = vadd.f32 %v434, %v248
    %v439 = vadd.f32 %v435, %v249
    %v440 = vadd.f32 %v436, %v250
    %v441 = vadd.f32 %v437, %v251
    %442 = vmatprep.subr.mxu0 %v47
    %443 = vmatpush1.msra.mxu0 %v46
    %444 = vmatprep.subr.mxu0 %v49
    %445 = vmatpush1.msra.mxu0 %v48
    %446 = vmatprep.subr.mxu0 %v51
    %447 = vmatpush1.msra.mxu0 %v50
    %448 = vmatprep.subr.mxu0 %v53
    %449 = vmatpush1.msra.mxu0 %v52
    %450 = vmatprep.subr.mxu0 %v55
    %451 = vmatpush1.msra.mxu0 %v54
    %452 = vmatprep.subr.mxu0 %v57
    %453 = vmatpush1.msra.mxu0 %v56
    %454 = vmatprep.subr.mxu0 %v59
    %455 = vmatpush1.msra.mxu0 %v58
    %456 = vmatprep.subr.mxu0 %v61
    %457 = vmatpush1.msra.mxu0 %v60
    %458 = vmatprep.subr.mxu0 %v63
    %459 = vmatpush1.msra.mxu0 %v62
    %460 = vmatprep.subr.mxu0 %v65
    %461 = vmatpush1.msra.mxu0 %v64
    %462 = vmatprep.subr.mxu0 %v67
    %463 = vmatpush1.msra.mxu0 %v66
    %464 = vmatprep.subr.mxu0 %v69
    %465 = vmatpush1.msra.mxu0 %v68
    %466 = vmatprep.subr.mxu0 %v71
    %467 = vmatpush1.msra.mxu0 %v70
    %468 = vmatprep.subr.mxu0 %v73
    %469 = vmatpush1.msra.mxu0 %v72
    %470 = vmatprep.subr.mxu0 %v75
    %471 = vmatpush1.msra.mxu0 %v74
    %472 = vmatprep.subr.mxu0 %v77
    %473 = vmatpush1.msra.mxu0 %v76
    %474 = vmatprep.subr.mxu0 %v79
    %475 = vmatpush1.msra.mxu0 %v78
    %476 = vmatprep.subr.mxu0 %v81
    %477 = vmatpush1.msra.mxu0 %v80
    %478 = vmatprep.subr.mxu0 %v83
    %479 = vmatpush1.msra.mxu0 %v82
    %480 = vmatprep.subr.mxu0 %v85
    %481 = vmatpush1.msra.mxu0 %v84
    %482 = vmatprep.subr.mxu0 %v87
    %483 = vmatpush1.msra.mxu0 %v86
    %484 = vmatprep.subr.mxu0 %v89
    %485 = vmatpush1.msra.mxu0 %v88
    %486 = vmatprep.subr.mxu0 %v91
    %487 = vmatpush1.msra.mxu0 %v90
    %488 = vmatprep.subr.mxu0 %v93
    %489 = vmatpush1.msra.mxu0 %v92
    %490 = vmatprep.subr.mxu0 %v95
    %491 = vmatpush1.msra.mxu0 %v94
    %492 = vmatprep.subr.mxu0 %v97
    %493 = vmatpush1.msra.mxu0 %v96
    %494 = vmatprep.subr.mxu0 %v99
    %495 = vmatpush1.msra.mxu0 %v98
    %496 = vmatprep.subr.mxu0 %v101
    %497 = vmatpush1.msra.mxu0 %v100
    %498 = vmatprep.subr.mxu0 %v103
    %499 = vmatpush1.msra.mxu0 %v102
    %500 = vmatprep.subr.mxu0 %v105
    %501 = vmatpush1.msra.mxu0 %v104
    %502 = vmatprep.subr.mxu0 %v107
    %503 = vmatpush1.msra.mxu0 %v106
    %504 = vmatprep.subr.mxu0 %v109
    %505 = vmatpush1.msra.mxu0 %v108
    %506 = vmatprep.mubr.f32.mxu0 %v439
    %507 = vmatmul.mubr.f32.gmra.mrb[0].mxu0 %v438
    %v508 = vpop.f32.mrb[0].mxu0
    %v509 = vadd.f32 0.0, %v508
    %v510 = vpop.f32.mrb[0].mxu0
    %v511 = vadd.f32 0.0, %v510
    %512 = vmatprep.mubr.f32.mxu0 %v441
    %513 = vmatmul.mubr.f32.gmra.mrb[0].mxu0 %v440
    %v514 = vpop.f32.mrb[0].mxu0
    %v515 = vadd.f32 0.0, %v514
    %v516 = vpop.f32.mrb[0].mxu0
    %v517 = vadd.f32 0.0, %v516
    %518 = vdwg.mxu0
    %v519 = vmul.f32 %v438, 0.0
    %v520 = vmul.f32 %v439, 0.0
    %v521 = vmul.f32 %v440, 0.0
    %v522 = vmul.f32 %v441, 0.0
    %v523 = vmul.f32 %v509, 0.5
    %v524 = vmul.f32 %v511, 0.5
    %v525 = vmul.f32 %v515, 0.5
    %v526 = vmul.f32 %v517, 0.5
    %v527 = vadd.f32 %v519, %v523
    %v528 = vadd.f32 %v520, %v524
    %v529 = vadd.f32 %v521, %v525
    %v530 = vadd.f32 %v522, %v526
    %v531 = vadd.f32 %v527, %v248
    %v532 = vadd.f32 %v528, %v249
    %v533 = vadd.f32 %v529, %v250
    %v534 = vadd.f32 %v530, %v251
    %535 = vmatprep.subr.mxu0 %v47
    %536 = vmatpush1.msra.mxu0 %v46
    %537 = vmatprep.subr.mxu0 %v49
    %538 = vmatpush1.msra.mxu0 %v48
    %539 = vmatprep.subr.mxu0 %v51
    %540 = vmatpush1.msra.mxu0 %v50
    %541 = vmatprep.subr.mxu0 %v53
    %542 = vmatpush1.msra.mxu0 %v52
    %543 = vmatprep.subr.mxu0 %v55
    %544 = vmatpush1.msra.mxu0 %v54
    %545 = vmatprep.subr.mxu0 %v57
    %546 = vmatpush1.msra.mxu0 %v56
    %547 = vmatprep.subr.mxu0 %v59
    %548 = vmatpush1.msra.mxu0 %v58
    %549 = vmatprep.subr.mxu0 %v61
    %550 = vmatpush1.msra.mxu0 %v60
    %551 = vmatprep.subr.mxu0 %v63
    %552 = vmatpush1.msra.mxu0 %v62
    %553 = vmatprep.subr.mxu0 %v65
    %554 = vmatpush1.msra.mxu0 %v64
    %555 = vmatprep.subr.mxu0 %v67
    %556 = vmatpush1.msra.mxu0 %v66
    %557 = vmatprep.subr.mxu0 %v69
    %558 = vmatpush1.msra.mxu0 %v68
    %559 = vmatprep.subr.mxu0 %v71
    %560 = vmatpush1.msra.mxu0 %v70
    %561 = vmatprep.subr.mxu0 %v73
    %562 = vmatpush1.msra.mxu0 %v72
    %563 = vmatprep.subr.mxu0 %v75
    %564 = vmatpush1.msra.mxu0 %v74
    %565 = vmatprep.subr.mxu0 %v77
    %566 = vmatpush1.msra.mxu0 %v76
    %567 = vmatprep.subr.mxu0 %v79
    %568 = vmatpush1.msra.mxu0 %v78
    %569 = vmatprep.subr.mxu0 %v81
    %570 = vmatpush1.msra.mxu0 %v80
    %571 = vmatprep.subr.mxu0 %v83
    %572 = vmatpush1.msra.mxu0 %v82
    %573 = vmatprep.subr.mxu0 %v85
    %574 = vmatpush1.msra.mxu0 %v84
    %575 = vmatprep.subr.mxu0 %v87
    %576 = vmatpush1.msra.mxu0 %v86
    %577 = vmatprep.subr.mxu0 %v89
    %578 = vmatpush1.msra.mxu0 %v88
    %579 = vmatprep.subr.mxu0 %v91
    %580 = vmatpush1.msra.mxu0 %v90
    %581 = vmatprep.subr.mxu0 %v93
    %582 = vmatpush1.msra.mxu0 %v92
    %583 = vmatprep.subr.mxu0 %v95
    %584 = vmatpush1.msra.mxu0 %v94
    %585 = vmatprep.subr.mxu0 %v97
    %586 = vmatpush1.msra.mxu0 %v96
    %587 = vmatprep.subr.mxu0 %v99
    %588 = vmatpush1.msra.mxu0 %v98
    %589 = vmatprep.subr.mxu0 %v101
    %590 = vmatpush1.msra.mxu0 %v100
    %591 = vmatprep.subr.mxu0 %v103
    %592 = vmatpush1.msra.mxu0 %v102
    %593 = vmatprep.subr.mxu0 %v105
    %594 = vmatpush1.msra.mxu0 %v104
    %595 = vmatprep.subr.mxu0 %v107
    %596 = vmatpush1.msra.mxu0 %v106
    %597 = vmatprep.subr.mxu0 %v109
    %598 = vmatpush1.msra.mxu0 %v108
    %599 = vmatprep.mubr.f32.mxu0 %v532
    %600 = vmatmul.mubr.f32.gmra.mrb[0].mxu0 %v531
    %v601 = vpop.f32.mrb[0].mxu0
    %v602 = vadd.f32 0.0, %v601
    %v603 = vpop.f32.mrb[0].mxu0
    %v604 = vadd.f32 0.0, %v603
    %605 = vmatprep.mubr.f32.mxu0 %v534
    %606 = vmatmul.mubr.f32.gmra.mrb[0].mxu0 %v533
    %v607 = vpop.f32.mrb[0].mxu0
    %v608 = vadd.f32 0.0, %v607
    %v609 = vpop.f32.mrb[0].mxu0
    %v610 = vadd.f32 0.0, %v609
    %611 = vdwg.mxu0
    %v612 = vmul.f32 %v531, 0.0
    %v613 = vmul.f32 %v532, 0.0
    %v614 = vmul.f32 %v533, 0.0
    %v615 = vmul.f32 %v534, 0.0
    %v616 = vmul.f32 %v602, 0.5
    %v617 = vmul.f32 %v604, 0.5
    %v618 = vmul.f32 %v608, 0.5
    %v619 = vmul.f32 %v610, 0.5
    %v620 = vadd.f32 %v612, %v616
    %v621 = vadd.f32 %v613, %v617
    %v622 = vadd.f32 %v614, %v618
    %v623 = vadd.f32 %v615, %v619
    %v624 = vadd.f32 %v620, %v248
    %v625 = vadd.f32 %v621, %v249
    %v626 = vadd.f32 %v622, %v250
    %v627 = vadd.f32 %v623, %v251
    %628 = vmatprep.subr.mxu0 %v47
    %629 = vmatpush1.msra.mxu0 %v46
    %630 = vmatprep.subr.mxu0 %v49
    %631 = vmatpush1.msra.mxu0 %v48
    %632 = vmatprep.subr.mxu0 %v51
    %633 = vmatpush1.msra.mxu0 %v50
    %634 = vmatprep.subr.mxu0 %v53
    %635 = vmatpush1.msra.mxu0 %v52
    %636 = vmatprep.subr.mxu0 %v55
    %637 = vmatpush1.msra.mxu0 %v54
    %638 = vmatprep.subr.mxu0 %v57
    %639 = vmatpush1.msra.mxu0 %v56
    %640 = vmatprep.subr.mxu0 %v59
    %641 = vmatpush1.msra.mxu0 %v58
    %642 = vmatprep.subr.mxu0 %v61
    %643 = vmatpush1.msra.mxu0 %v60
    %644 = vmatprep.subr.mxu0 %v63
    %645 = vmatpush1.msra.mxu0 %v62
    %646 = vmatprep.subr.mxu0 %v65
    %647 = vmatpush1.msra.mxu0 %v64
    %648 = vmatprep.subr.mxu0 %v67
    %649 = vmatpush1.msra.mxu0 %v66
    %650 = vmatprep.subr.mxu0 %v69
    %651 = vmatpush1.msra.mxu0 %v68
    %652 = vmatprep.subr.mxu0 %v71
    %653 = vmatpush1.msra.mxu0 %v70
    %654 = vmatprep.subr.mxu0 %v73
    %655 = vmatpush1.msra.mxu0 %v72
    %656 = vmatprep.subr.mxu0 %v75
    %657 = vmatpush1.msra.mxu0 %v74
    %658 = vmatprep.subr.mxu0 %v77
    %659 = vmatpush1.msra.mxu0 %v76
    %660 = vmatprep.subr.mxu0 %v79
    %661 = vmatpush1.msra.mxu0 %v78
    %662 = vmatprep.subr.mxu0 %v81
    %663 = vmatpush1.msra.mxu0 %v80
    %664 = vmatprep.subr.mxu0 %v83
    %665 = vmatpush1.msra.mxu0 %v82
    %666 = vmatprep.subr.mxu0 %v85
    %667 = vmatpush1.msra.mxu0 %v84
    %668 = vmatprep.subr.mxu0 %v87
    %669 = vmatpush1.msra.mxu0 %v86
    %670 = vmatprep.subr.mxu0 %v89
    %671 = vmatpush1.msra.mxu0 %v88
    %672 = vmatprep.subr.mxu0 %v91
    %673 = vmatpush1.msra.mxu0 %v90
    %674 = vmatprep.subr.mxu0 %v93
    %675 = vmatpush1.msra.mxu0 %v92
    %676 = vmatprep.subr.mxu0 %v95
    %677 = vmatpush1.msra.mxu0 %v94
    %678 = vmatprep.subr.mxu0 %v97
    %679 = vmatpush1.msra.mxu0 %v96
    %680 = vmatprep.subr.mxu0 %v99
    %681 = vmatpush1.msra.mxu0 %v98
    %682 = vmatprep.subr.mxu0 %v101
    %683 = vmatpush1.msra.mxu0 %v100
    %684 = vmatprep.subr.mxu0 %v103
    %685 = vmatpush1.msra.mxu0 %v102
    %686 = vmatprep.subr.mxu0 %v105
    %687 = vmatpush1.msra.mxu0 %v104
    %688 = vmatprep.subr.mxu0 %v107
    %689 = vmatpush1.msra.mxu0 %v106
    %690 = vmatprep.subr.mxu0 %v109
    %691 = vmatpush1.msra.mxu0 %v108
    %692 = vmatprep.mubr.f32.mxu0 %v625
    %693 = vmatmul.mubr.f32.gmra.mrb[0].mxu0 %v624
    %v694 = vpop.f32.mrb[0].mxu0
    %v695 = vadd.f32 0.0, %v694
    %v696 = vpop.f32.mrb[0].mxu0
    %v697 = vadd.f32 0.0, %v696
    %698 = vmatprep.mubr.f32.mxu0 %v627
    %699 = vmatmul.mubr.f32.gmra.mrb[0].mxu0 %v626
    %v700 = vpop.f32.mrb[0].mxu0
    %v701 = vadd.f32 0.0, %v700
    %v702 = vpop.f32.mrb[0].mxu0
    %v703 = vadd.f32 0.0, %v702
    %704 = vdwg.mxu0
    %v705 = vmul.f32 %v624, 0.0
    %v706 = vmul.f32 %v625, 0.0
    %v707 = vmul.f32 %v626, 0.0
    %v708 = vmul.f32 %v627, 0.0
    %v709 = vmul.f32 %v695, 0.5
    %v710 = vmul.f32 %v697, 0.5
    %v711 = vmul.f32 %v701, 0.5
    %v712 = vmul.f32 %v703, 0.5
    %v713 = vadd.f32 %v705, %v709
    %v714 = vadd.f32 %v706, %v710
    %v715 = vadd.f32 %v707, %v711
    %v716 = vadd.f32 %v708, %v712
    %v717 = vadd.f32 %v713, %v252
    %v718 = vadd.f32 %v714, %v253
    %v719 = vadd.f32 %v715, %v254
    %v720 = vadd.f32 %v716, %v255
    %721 = vmatprep.subr.mxu0 %v47
    %722 = vmatpush1.msra.mxu0 %v46
    %723 = vmatprep.subr.mxu0 %v49
    %724 = vmatpush1.msra.mxu0 %v48
    %725 = vmatprep.subr.mxu0 %v51
    %726 = vmatpush1.msra.mxu0 %v50
    %727 = vmatprep.subr.mxu0 %v53
    %728 = vmatpush1.msra.mxu0 %v52
    %729 = vmatprep.subr.mxu0 %v55
    %730 = vmatpush1.msra.mxu0 %v54
    %731 = vmatprep.subr.mxu0 %v57
    %732 = vmatpush1.msra.mxu0 %v56
    %733 = vmatprep.subr.mxu0 %v59
    %734 = vmatpush1.msra.mxu0 %v58
    %735 = vmatprep.subr.mxu0 %v61
    %736 = vmatpush1.msra.mxu0 %v60
    %737 = vmatprep.subr.mxu0 %v63
    %738 = vmatpush1.msra.mxu0 %v62
    %739 = vmatprep.subr.mxu0 %v65
    %740 = vmatpush1.msra.mxu0 %v64
    %741 = vmatprep.subr.mxu0 %v67
    %742 = vmatpush1.msra.mxu0 %v66
    %743 = vmatprep.subr.mxu0 %v69
    %744 = vmatpush1.msra.mxu0 %v68
    %745 = vmatprep.subr.mxu0 %v71
    %746 = vmatpush1.msra.mxu0 %v70
    %747 = vmatprep.subr.mxu0 %v73
    %748 = vmatpush1.msra.mxu0 %v72
    %749 = vmatprep.subr.mxu0 %v75
    %750 = vmatpush1.msra.mxu0 %v74
    %751 = vmatprep.subr.mxu0 %v77
    %752 = vmatpush1.msra.mxu0 %v76
    %753 = vmatprep.subr.mxu0 %v79
    %754 = vmatpush1.msra.mxu0 %v78
    %755 = vmatprep.subr.mxu0 %v81
    %756 = vmatpush1.msra.mxu0 %v80
    %757 = vmatprep.subr.mxu0 %v83
    %758 = vmatpush1.msra.mxu0 %v82
    %759 = vmatprep.subr.mxu0 %v85
    %760 = vmatpush1.msra.mxu0 %v84
    %761 = vmatprep.subr.mxu0 %v87
    %762 = vmatpush1.msra.mxu0 %v86
    %763 = vmatprep.subr.mxu0 %v89
    %764 = vmatpush1.msra.mxu0 %v88
    %765 = vmatprep.subr.mxu0 %v91
    %766 = vmatpush1.msra.mxu0 %v90
    %767 = vmatprep.subr.mxu0 %v93
    %768 = vmatpush1.msra.mxu0 %v92
    %769 = vmatprep.subr.mxu0 %v95
    %770 = vmatpush1.msra.mxu0 %v94
    %771 = vmatprep.subr.mxu0 %v97
    %772 = vmatpush1.msra.mxu0 %v96
    %773 = vmatprep.subr.mxu0 %v99
    %774 = vmatpush1.msra.mxu0 %v98
    %775 = vmatprep.subr.mxu0 %v101
    %776 = vmatpush1.msra.mxu0 %v100
    %777 = vmatprep.subr.mxu0 %v103
    %778 = vmatpush1.msra.mxu0 %v102
    %779 = vmatprep.subr.mxu0 %v105
    %780 = vmatpush1.msra.mxu0 %v104
    %781 = vmatprep.subr.mxu0 %v107
    %782 = vmatpush1.msra.mxu0 %v106
    %783 = vmatprep.subr.mxu0 %v109
    %784 = vmatpush1.msra.mxu0 %v108
    %785 = vmatprep.mubr.f32.mxu0 %v718
    %786 = vmatmul.mubr.f32.gmra.mrb[0].mxu0 %v717
    %v787 = vpop.f32.mrb[0].mxu0
    %v788 = vadd.f32 0.0, %v787
    %v789 = vpop.f32.mrb[0].mxu0
    %v790 = vadd.f32 0.0, %v789
    %791 = vmatprep.mubr.f32.mxu0 %v720
    %792 = vmatmul.mubr.f32.gmra.mrb[0].mxu0 %v719
    %v793 = vpop.f32.mrb[0].mxu0
    %v794 = vadd.f32 0.0, %v793
    %v795 = vpop.f32.mrb[0].mxu0
    %v796 = vadd.f32 0.0, %v795
    %797 = vdwg.mxu0
    %v798 = vmul.f32 %v717, 0.0
    %v799 = vmul.f32 %v718, 0.0
    %v800 = vmul.f32 %v719, 0.0
    %v801 = vmul.f32 %v720, 0.0
    %v802 = vmul.f32 %v788, 0.5
    %v803 = vmul.f32 %v790, 0.5
    %v804 = vmul.f32 %v794, 0.5
    %v805 = vmul.f32 %v796, 0.5
    %v806 = vadd.f32 %v798, %v802
    %v807 = vadd.f32 %v799, %v803
    %v808 = vadd.f32 %v800, %v804
    %v809 = vadd.f32 %v801, %v805
    %v810 = vadd.f32 %v806, %v252
    %v811 = vadd.f32 %v807, %v253
    %v812 = vadd.f32 %v808, %v254
    %v813 = vadd.f32 %v809, %v255
    %814 = vmatprep.subr.mxu0 %v47
    %815 = vmatpush1.msra.mxu0 %v46
    %816 = vmatprep.subr.mxu0 %v49
    %817 = vmatpush1.msra.mxu0 %v48
    %818 = vmatprep.subr.mxu0 %v51
    %819 = vmatpush1.msra.mxu0 %v50
    %820 = vmatprep.subr.mxu0 %v53
    %821 = vmatpush1.msra.mxu0 %v52
    %822 = vmatprep.subr.mxu0 %v55
    %823 = vmatpush1.msra.mxu0 %v54
    %824 = vmatprep.subr.mxu0 %v57
    %825 = vmatpush1.msra.mxu0 %v56
    %826 = vmatprep.subr.mxu0 %v59
    %827 = vmatpush1.msra.mxu0 %v58
    %828 = vmatprep.subr.mxu0 %v61
    %829 = vmatpush1.msra.mxu0 %v60
    %830 = vmatprep.subr.mxu0 %v63
    %831 = vmatpush1.msra.mxu0 %v62
    %832 = vmatprep.subr.mxu0 %v65
    %833 = vmatpush1.msra.mxu0 %v64
    %834 = vmatprep.subr.mxu0 %v67
    %835 = vmatpush1.msra.mxu0 %v66
    %836 = vmatprep.subr.mxu0 %v69
    %837 = vmatpush1.msra.mxu0 %v68
    %838 = vmatprep.subr.mxu0 %v71
    %839 = vmatpush1.msra.mxu0 %v70
    %840 = vmatprep.subr.mxu0 %v73
    %841 = vmatpush1.msra.mxu0 %v72
    %842 = vmatprep.subr.mxu0 %v75
    %843 = vmatpush1.msra.mxu0 %v74
    %844 = vmatprep.subr.mxu0 %v77
    %845 = vmatpush1.msra.mxu0 %v76
    %846 = vmatprep.subr.mxu0 %v79
    %847 = vmatpush1.msra.mxu0 %v78
    %848 = vmatprep.subr.mxu0 %v81
    %849 = vmatpush1.msra.mxu0 %v80
    %850 = vmatprep.subr.mxu0 %v83
    %851 = vmatpush1.msra.mxu0 %v82
    %852 = vmatprep.subr.mxu0 %v85
    %853 = vmatpush1.msra.mxu0 %v84
    %854 = vmatprep.subr.mxu0 %v87
    %855 = vmatpush1.msra.mxu0 %v86
    %856 = vmatprep.subr.mxu0 %v89
    %857 = vmatpush1.msra.mxu0 %v88
    %858 = vmatprep.subr.mxu0 %v91
    %859 = vmatpush1.msra.mxu0 %v90
    %860 = vmatprep.subr.mxu0 %v93
    %861 = vmatpush1.msra.mxu0 %v92
    %862 = vmatprep.subr.mxu0 %v95
    %863 = vmatpush1.msra.mxu0 %v94
    %864 = vmatprep.subr.mxu0 %v97
    %865 = vmatpush1.msra.mxu0 %v96
    %866 = vmatprep.subr.mxu0 %v99
    %867 = vmatpush1.msra.mxu0 %v98
    %868 = vmatprep.subr.mxu0 %v101
    %869 = vmatpush1.msra.mxu0 %v100
    %870 = vmatprep.subr.mxu0 %v103
    %871 = vmatpush1.msra.mxu0 %v102
    %872 = vmatprep.subr.mxu0 %v105
    %873 = vmatpush1.msra.mxu0 %v104
    %874 = vmatprep.subr.mxu0 %v107
    %875 = vmatpush1.msra.mxu0 %v106
    %876 = vmatprep.subr.mxu0 %v109
    %877 = vmatpush1.msra.mxu0 %v108
    %878 = vmatprep.mubr.f32.mxu0 %v811
    %879 = vmatmul.mubr.f32.gmra.mrb[0].mxu0 %v810
    %v880 = vpop.f32.mrb[0].mxu0
    %v881 = vadd.f32 0.0, %v880
    %v882 = vpop.f32.mrb[0].mxu0
    %v883 = vadd.f32 0.0, %v882
    %884 = vmatprep.mubr.f32.mxu0 %v813
    %885 = vmatmul.mubr.f32.gmra.mrb[0].mxu0 %v812
    %v886 = vpop.f32.mrb[0].mxu0
    %v887 = vadd.f32 0.0, %v886
    %v888 = vpop.f32.mrb[0].mxu0
    %v889 = vadd.f32 0.0, %v888
    %890 = vdwg.mxu0
    %v891 = vmul.f32 %v810, 0.0
    %v892 = vmul.f32 %v811, 0.0
    %v893 = vmul.f32 %v812, 0.0
    %v894 = vmul.f32 %v813, 0.0
    %v895 = vmul.f32 %v881, 0.5
    %v896 = vmul.f32 %v883, 0.5
    %v897 = vmul.f32 %v887, 0.5
    %v898 = vmul.f32 %v889, 0.5
    %v899 = vadd.f32 %v891, %v895
    %v900 = vadd.f32 %v892, %v896
    %v901 = vadd.f32 %v893, %v897
    %v902 = vadd.f32 %v894, %v898
    %v903 = vadd.f32 %v899, %v252
    %v904 = vadd.f32 %v900, %v253
    %v905 = vadd.f32 %v901, %v254
    %v906 = vadd.f32 %v902, %v255
    %907 = vmatprep.subr.mxu0 %v47
    %908 = vmatpush1.msra.mxu0 %v46
    %909 = vmatprep.subr.mxu0 %v49
    %910 = vmatpush1.msra.mxu0 %v48
    %911 = vmatprep.subr.mxu0 %v51
    %912 = vmatpush1.msra.mxu0 %v50
    %913 = vmatprep.subr.mxu0 %v53
    %914 = vmatpush1.msra.mxu0 %v52
    %915 = vmatprep.subr.mxu0 %v55
    %916 = vmatpush1.msra.mxu0 %v54
    %917 = vmatprep.subr.mxu0 %v57
    %918 = vmatpush1.msra.mxu0 %v56
    %919 = vmatprep.subr.mxu0 %v59
    %920 = vmatpush1.msra.mxu0 %v58
    %921 = vmatprep.subr.mxu0 %v61
    %922 = vmatpush1.msra.mxu0 %v60
    %923 = vmatprep.subr.mxu0 %v63
    %924 = vmatpush1.msra.mxu0 %v62
    %925 = vmatprep.subr.mxu0 %v65
    %926 = vmatpush1.msra.mxu0 %v64
    %927 = vmatprep.subr.mxu0 %v67
    %928 = vmatpush1.msra.mxu0 %v66
    %929 = vmatprep.subr.mxu0 %v69
    %930 = vmatpush1.msra.mxu0 %v68
    %931 = vmatprep.subr.mxu0 %v71
    %932 = vmatpush1.msra.mxu0 %v70
    %933 = vmatprep.subr.mxu0 %v73
    %934 = vmatpush1.msra.mxu0 %v72
    %935 = vmatprep.subr.mxu0 %v75
    %936 = vmatpush1.msra.mxu0 %v74
    %937 = vmatprep.subr.mxu0 %v77
    %938 = vmatpush1.msra.mxu0 %v76
    %939 = vmatprep.subr.mxu0 %v79
    %940 = vmatpush1.msra.mxu0 %v78
    %941 = vmatprep.subr.mxu0 %v81
    %942 = vmatpush1.msra.mxu0 %v80
    %943 = vmatprep.subr.mxu0 %v83
    %944 = vmatpush1.msra.mxu0 %v82
    %945 = vmatprep.subr.mxu0 %v85
    %946 = vmatpush1.msra.mxu0 %v84
    %947 = vmatprep.subr.mxu0 %v87
    %948 = vmatpush1.msra.mxu0 %v86
    %949 = vmatprep.subr.mxu0 %v89
    %950 = vmatpush1.msra.mxu0 %v88
    %951 = vmatprep.subr.mxu0 %v91
    %952 = vmatpush1.msra.mxu0 %v90
    %953 = vmatprep.subr.mxu0 %v93
    %954 = vmatpush1.msra.mxu0 %v92
    %955 = vmatprep.subr.mxu0 %v95
    %956 = vmatpush1.msra.mxu0 %v94
    %957 = vmatprep.subr.mxu0 %v97
    %958 = vmatpush1.msra.mxu0 %v96
    %959 = vmatprep.subr.mxu0 %v99
    %960 = vmatpush1.msra.mxu0 %v98
    %961 = vmatprep.subr.mxu0 %v101
    %962 = vmatpush1.msra.mxu0 %v100
    %963 = vmatprep.subr.mxu0 %v103
    %964 = vmatpush1.msra.mxu0 %v102
    %965 = vmatprep.subr.mxu0 %v105
    %966 = vmatpush1.msra.mxu0 %v104
    %967 = vmatprep.subr.mxu0 %v107
    %968 = vmatpush1.msra.mxu0 %v106
    %969 = vmatprep.subr.mxu0 %v109
    %970 = vmatpush1.msra.mxu0 %v108
    %971 = vmatprep.mubr.f32.mxu0 %v904
    %972 = vmatmul.mubr.f32.gmra.mrb[0].mxu0 %v903
    %v973 = vpop.f32.mrb[0].mxu0
    %v974 = vadd.f32 0.0, %v973
    %v975 = vpop.f32.mrb[0].mxu0
    %v976 = vadd.f32 0.0, %v975
    %977 = vmatprep.mubr.f32.mxu0 %v906
    %978 = vmatmul.mubr.f32.gmra.mrb[0].mxu0 %v905
    %v979 = vpop.f32.mrb[0].mxu0
    %v980 = vadd.f32 0.0, %v979
    %v981 = vpop.f32.mrb[0].mxu0
    %v982 = vadd.f32 0.0, %v981
    %983 = vdwg.mxu0
    %v984 = vmul.f32 %v903, 0.0
    %v985 = vmul.f32 %v904, 0.0
    %v986 = vmul.f32 %v905, 0.0
    %v987 = vmul.f32 %v906, 0.0
    %v988 = vmul.f32 %v974, 0.5
    %v989 = vmul.f32 %v976, 0.5
    %v990 = vmul.f32 %v980, 0.5
    %v991 = vmul.f32 %v982, 0.5
    %v992 = vadd.f32 %v984, %v988
    %v993 = vadd.f32 %v985, %v989
    %v994 = vadd.f32 %v986, %v990
    %v995 = vadd.f32 %v987, %v991
    %v996 = vadd.f32 %v992, %v252
    %v997 = vadd.f32 %v993, %v253
    %v998 = vadd.f32 %v994, %v254
    %v999 = vadd.f32 %v995, %v255
    %1000 = vst [vmem:[#allocation7] sm:$0xff] %v996
    %1001 = vst [vmem:[#allocation7 + $0x8] sm:$0xff] %v997
    %1002 = vst [vmem:[#allocation7 + $0x10] sm:$0xff] %v998
    %1003 = vst [vmem:[#allocation7 + $0x18] sm:$0xff] %v999
    // Predicated region
    $region26: #{tpu_custom_call.1} parent=1 // pred_check
      _
    $region27: #{tpu_custom_call.1} parent=1 // pred_check_branch
      %1005 = sbr.rel (0) target = $region29
    $region28: #{tpu_custom_call.1} parent=1 // pred_region
      %s1007 = ssub.s32 512, 512
      %1008 = vsyncadd [#allocation4], %s1007
      %s1009 = sshll.u32 [#allocation7], 4
      %s1010 = int_to_ptr.vmem [resolvable:$true] %s1009
      %1015 = dma.vmem_to_hbm [thread:$0]  %s1010, 512, %s4, [#allocation4], 256, 256, 16
    $region29: #{tpu_custom_call.1} parent=1 // pred_fallthru
      _
    // Predicated region
    $region30: #{tpu_custom_call.1} parent=1 // pred_check
      _
    $region31: #{tpu_custom_call.1} parent=1 // pred_check_branch
      %1017 = sbr.rel (0) target = $region33
    $region32: #{tpu_custom_call.1} parent=1 // pred_region
      %1018 = dma.done [#allocation4], 512
    $region33: #{tpu_custom_call.1} parent=1 // pred_fallthru
      _
    %1019 = vsyncpa [#allocation3], 1
    %1020 = vsyncpa [#allocation6], 1
    %1021 = vsyncpa [#allocation4], 1

</llo_original>
